<compile_context>
chip_gen: v7x
topology: tpu7x:2x2x1
jax: 0.10.0
libtpu: 0.0.40
codegen_flags: <defaults>
</compile_context>

<pallas_src>
import functools

import jax
import jax.numpy as jnp
from jax.experimental import pallas as pl


def gru_fc_kernel(x2_ref, wi_ref, wh_ref, bias_ref, wfc_ref, out_ref,
                  *, seq_len, batch_pad, batch, hidden):
    H = hidden
    BP = batch_pad

    # --- Load packed operands once (hoisted off the recurrence). -------------
    x2 = x2_ref[...]                              # (S*BP, I)  time-major, padded
    W_i = wi_ref[...]                             # (I, 3H)    gates r|z|n on lanes
    W_h = wh_ref[...]                             # (H, 3H)
    bias = bias_ref[...]                          # (1, 4H) = [b_r, b_z, b_in, b_hn]
    b_gates = bias[:, 0:3 * H]                    # (1, 3H)  r/z pre-summed, n = b_in
    b_hn = bias[:, 3 * H:4 * H]                   # (1, H)   stays inside r*(...)
    wfc_aug = wfc_ref[...]                        # (H+1, O) last row = fc bias
    W_fc = wfc_aug[0:H, :]
    b_fc = wfc_aug[H:H + 1, :]

    # --- Hoisted, time-parallel input projection: ONE MXU matmul. ------------
    gi = jnp.dot(x2, W_i, preferred_element_type=jnp.float32) + b_gates  # (S*BP, 3H)

    # --- Recurrence: h in vregs, one fused (BP,H)@(H,3H) matmul per step. ----
    h = jnp.zeros((BP, H), jnp.float32)
    for s in range(seq_len):
        lo = s * BP                               # multiple of 8 -> sublane aligned
        g = gi[lo:lo + BP, :]                     # (BP, 3H) aligned vreg read
        gh = jnp.dot(h, W_h, preferred_element_type=jnp.float32)   # (BP, 3H)
        r = jax.nn.sigmoid(g[:, 0:H] + gh[:, 0:H])
        z = jax.nn.sigmoid(g[:, H:2 * H] + gh[:, H:2 * H])
        n = jnp.tanh(g[:, 2 * H:3 * H] + r * (gh[:, 2 * H:3 * H] + b_hn))
        h = (1.0 - z) * n + z * h

    # --- Fused fc on the final hidden state (padded rows are free on MXU). ---
    out = jnp.dot(h, W_fc, preferred_element_type=jnp.float32) + b_fc    # (BP, O)
    out_ref[...] = out[0:batch, :].astype(out_ref.dtype)


def gru_linear_forward(x, w_ih, w_hh, b_ih, b_hh, w_fc, b_fc):
    """x: (S, B, I); weights in PyTorch nn.GRU / nn.Linear layout.

    All packing below should ideally be done once at parameter-load time (it
    constant-folds under jit if the params are constants); it is kept here so
    the script is self-contained.
    """
    S, B, I = x.shape
    H = w_hh.shape[1]
    O = w_fc.shape[0]
    BP = max(8, ((B + 7) // 8) * 8)               # f32 sublane granularity

    # PyTorch fused layout is [W_r; W_z; W_n] stacked on dim 0 -> transposing
    # gives gate order r|z|n along lanes directly (no per-gate splitting).
    w_i_cat = jnp.transpose(w_ih)                 # (I, 3H)
    w_h_cat = jnp.transpose(w_hh)                 # (H, 3H)

    # Bias slab (1, 4H): r/z biases pre-summed; n-gate input bias separate;
    # b_hh_n last (it lives inside r * (h @ W_hn + b_hh_n)).
    bias_cat = jnp.concatenate([
        b_ih[0:H] + b_hh[0:H],
        b_ih[H:2 * H] + b_hh[H:2 * H],
        b_ih[2 * H:3 * H],
        b_hh[2 * H:3 * H],
    ]).reshape(1, 4 * H)

    # Pack fc weight + bias into one operand: rows 0..H-1 = W_fc^T, row H = b_fc.
    wfc_aug = jnp.concatenate([jnp.transpose(w_fc), b_fc.reshape(1, O)], axis=0)

    # Time-major flatten with batch padded to BP zero rows per timestep so the
    # in-kernel per-step slices are (8,128)-tile aligned.
    x_pad = jnp.zeros((S, BP, I), x.dtype).at[:, :B, :].set(x)
    x2 = x_pad.reshape(S * BP, I)

    kernel = functools.partial(gru_fc_kernel, seq_len=S, batch_pad=BP,
                               batch=B, hidden=H)

    # Single invocation, no grid: 5 packed operands, all whole-array in VMEM.
    return pl.pallas_call(
        kernel,
        out_shape=jax.ShapeDtypeStruct((B, O), x.dtype),
    )(x2, w_i_cat, w_h_cat, bias_cat, wfc_aug)


def _reference(x, w_ih, w_hh, b_ih, b_hh, w_fc, b_fc):
    """Pure-JAX reference matching PyTorch nn.GRU + nn.Linear semantics."""
    S, B, I = x.shape
    H = w_hh.shape[1]

    def step(h, x_t):
        gi = x_t @ w_ih.T + b_ih
        gh = h @ w_hh.T + b_hh
        i_r, i_z, i_n = gi[:, :H], gi[:, H:2 * H], gi[:, 2 * H:]
        h_r, h_z, h_n = gh[:, :H], gh[:, H:2 * H], gh[:, 2 * H:]
        r = jax.nn.sigmoid(i_r + h_r)
        z = jax.nn.sigmoid(i_z + h_z)
        n = jnp.tanh(i_n + r * h_n)
        h_new = (1.0 - z) * n + z * h
        return h_new, None

    h0 = jnp.zeros((B, H), dtype=x.dtype)
    h_last, _ = jax.lax.scan(step, h0, x)
    return h_last @ w_fc.T + b_fc


if __name__ == "__main__":
    # Small shapes consistent with the module's forward pass.
    seq_len, batch, input_size, hidden_size, output_size = 8, 2, 4, 32, 8

    key = jax.random.PRNGKey(0)
    ks = jax.random.split(key, 8)
    bound = 1.0 / (hidden_size ** 0.5)

    # Deterministic parameter init (PyTorch-style uniform(-1/sqrt(H), 1/sqrt(H))).
    w_ih = jax.random.uniform(ks[0], (3 * hidden_size, input_size),
                              jnp.float32, -bound, bound)
    w_hh = jax.random.uniform(ks[1], (3 * hidden_size, hidden_size),
                              jnp.float32, -bound, bound)
    b_ih = jax.random.uniform(ks[2], (3 * hidden_size,), jnp.float32, -bound, bound)
    b_hh = jax.random.uniform(ks[3], (3 * hidden_size,), jnp.float32, -bound, bound)
    w_fc = jax.random.uniform(ks[4], (output_size, hidden_size),
                              jnp.float32, -bound, bound)
    b_fc = jax.random.uniform(ks[5], (output_size,), jnp.float32, -bound, bound)

    x = jax.random.normal(ks[6], (seq_len, batch, input_size), jnp.float32)

    out = gru_linear_forward(x, w_ih, w_hh, b_ih, b_hh, w_fc, b_fc)
    out = jax.block_until_ready(out)

    ref = _reference(x, w_ih, w_hh, b_ih, b_hh, w_fc, b_fc)
    assert out.shape == (batch, output_size)
    assert jnp.allclose(out, ref, atol=1e-5, rtol=1e-5), (out, ref)

    print("KERNEL_OK")
</pallas_src>

<mosaic_0001>
module attributes {stable_mosaic.version = 11 : i64} {
  func.func @gru_fc_kernel(%arg0: memref<64x4xf32, #tpu.memory_space<vmem>>, %arg1: memref<4x96xf32, #tpu.memory_space<vmem>>, %arg2: memref<32x96xf32, #tpu.memory_space<vmem>>, %arg3: memref<1x128xf32, #tpu.memory_space<vmem>>, %arg4: memref<33x8xf32, #tpu.memory_space<vmem>>, %arg5: memref<2x8xf32, #tpu.memory_space<vmem>>) attributes {dimension_semantics = [], scalar_prefetch = 0 : i64, scratch_operands = 0 : i64, tpu.core_type = #tpu.core_type<tc>} {
    %c0 = arith.constant 0 : index
    %c0_0 = arith.constant 0 : index
    %0 = vector.load %arg0[%c0, %c0_0] : memref<64x4xf32, #tpu.memory_space<vmem>>, vector<64x4xf32>
    %c0_1 = arith.constant 0 : index
    %c0_2 = arith.constant 0 : index
    %1 = vector.load %arg1[%c0_1, %c0_2] : memref<4x96xf32, #tpu.memory_space<vmem>>, vector<4x96xf32>
    %c0_3 = arith.constant 0 : index
    %c0_4 = arith.constant 0 : index
    %2 = vector.load %arg2[%c0_3, %c0_4] : memref<32x96xf32, #tpu.memory_space<vmem>>, vector<32x96xf32>
    %c0_5 = arith.constant 0 : index
    %c0_6 = arith.constant 0 : index
    %3 = vector.load %arg3[%c0_5, %c0_6] : memref<1x128xf32, #tpu.memory_space<vmem>>, vector<1x128xf32>
    %4 = vector.extract_strided_slice %3 {offsets = [0, 0], sizes = [1, 96], strides = [1, 1]} : vector<1x128xf32> to vector<1x96xf32>
    %5 = vector.extract_strided_slice %3 {offsets = [0, 96], sizes = [1, 32], strides = [1, 1]} : vector<1x128xf32> to vector<1x32xf32>
    %c0_7 = arith.constant 0 : index
    %c0_8 = arith.constant 0 : index
    %6 = vector.load %arg4[%c0_7, %c0_8] : memref<33x8xf32, #tpu.memory_space<vmem>>, vector<33x8xf32>
    %7 = vector.extract_strided_slice %6 {offsets = [0, 0], sizes = [32, 8], strides = [1, 1]} : vector<33x8xf32> to vector<32x8xf32>
    %8 = vector.extract_strided_slice %6 {offsets = [32, 0], sizes = [1, 8], strides = [1, 1]} : vector<33x8xf32> to vector<1x8xf32>
    %cst = arith.constant dense<0.000000e+00> : vector<64x96xf32>
    %9 = tpu.matmul %0, %1, %cst {dimension_numbers = #tpu.dot_dimension_numbers<[1], [0], [0], [1], [0, 0, 1, 1], [], []>} : vector<64x4xf32>, vector<4x96xf32>, vector<64x96xf32> -> vector<64x96xf32>
    %10 = vector.broadcast %4 : vector<1x96xf32> to vector<64x96xf32>
    %11 = arith.addf %9, %10 : vector<64x96xf32>
    %cst_9 = arith.constant 0.000000e+00 : f32
    %12 = vector.broadcast %cst_9 : f32 to vector<8x32xf32>
    %13 = vector.extract_strided_slice %11 {offsets = [0, 0], sizes = [8, 96], strides = [1, 1]} : vector<64x96xf32> to vector<8x96xf32>
    %cst_10 = arith.constant dense<0.000000e+00> : vector<8x96xf32>
    %14 = tpu.matmul %12, %2, %cst_10 {dimension_numbers = #tpu.dot_dimension_numbers<[1], [0], [0], [1], [0, 0, 1, 1], [], []>} : vector<8x32xf32>, vector<32x96xf32>, vector<8x96xf32> -> vector<8x96xf32>
    %15 = vector.extract_strided_slice %13 {offsets = [0, 0], sizes = [8, 32], strides = [1, 1]} : vector<8x96xf32> to vector<8x32xf32>
    %16 = vector.extract_strided_slice %14 {offsets = [0, 0], sizes = [8, 32], strides = [1, 1]} : vector<8x96xf32> to vector<8x32xf32>
    %17 = arith.addf %15, %16 : vector<8x32xf32>
    %18 = arith.negf %17 : vector<8x32xf32>
    %19 = math.exp %18 : vector<8x32xf32>
    %cst_11 = arith.constant 1.000000e+00 : f32
    %20 = vector.broadcast %cst_11 : f32 to vector<8x32xf32>
    %21 = arith.addf %20, %19 : vector<8x32xf32>
    %22 = arith.divf %20, %21 : vector<8x32xf32>
    %23 = vector.extract_strided_slice %13 {offsets = [0, 32], sizes = [8, 32], strides = [1, 1]} : vector<8x96xf32> to vector<8x32xf32>
    %24 = vector.extract_strided_slice %14 {offsets = [0, 32], sizes = [8, 32], strides = [1, 1]} : vector<8x96xf32> to vector<8x32xf32>
    %25 = arith.addf %23, %24 : vector<8x32xf32>
    %26 = arith.negf %25 : vector<8x32xf32>
    %27 = math.exp %26 : vector<8x32xf32>
    %cst_12 = arith.constant 1.000000e+00 : f32
    %28 = vector.broadcast %cst_12 : f32 to vector<8x32xf32>
    %29 = arith.addf %28, %27 : vector<8x32xf32>
    %30 = arith.divf %28, %29 : vector<8x32xf32>
    %31 = vector.extract_strided_slice %13 {offsets = [0, 64], sizes = [8, 32], strides = [1, 1]} : vector<8x96xf32> to vector<8x32xf32>
    %32 = vector.extract_strided_slice %14 {offsets = [0, 64], sizes = [8, 32], strides = [1, 1]} : vector<8x96xf32> to vector<8x32xf32>
    %33 = vector.broadcast %5 : vector<1x32xf32> to vector<8x32xf32>
    %34 = arith.addf %32, %33 : vector<8x32xf32>
    %35 = arith.mulf %22, %34 : vector<8x32xf32>
    %36 = arith.addf %31, %35 : vector<8x32xf32>
    %37 = math.tanh %36 : vector<8x32xf32>
    %cst_13 = arith.constant 1.000000e+00 : f32
    %38 = vector.broadcast %cst_13 : f32 to vector<8x32xf32>
    %39 = arith.subf %38, %30 : vector<8x32xf32>
    %40 = arith.mulf %39, %37 : vector<8x32xf32>
    %41 = arith.mulf %30, %12 : vector<8x32xf32>
    %42 = arith.addf %40, %41 : vector<8x32xf32>
    %43 = vector.extract_strided_slice %11 {offsets = [8, 0], sizes = [8, 96], strides = [1, 1]} : vector<64x96xf32> to vector<8x96xf32>
    %cst_14 = arith.constant dense<0.000000e+00> : vector<8x96xf32>
    %44 = tpu.matmul %42, %2, %cst_14 {dimension_numbers = #tpu.dot_dimension_numbers<[1], [0], [0], [1], [0, 0, 1, 1], [], []>} : vector<8x32xf32>, vector<32x96xf32>, vector<8x96xf32> -> vector<8x96xf32>
    %45 = vector.extract_strided_slice %43 {offsets = [0, 0], sizes = [8, 32], strides = [1, 1]} : vector<8x96xf32> to vector<8x32xf32>
    %46 = vector.extract_strided_slice %44 {offsets = [0, 0], sizes = [8, 32], strides = [1, 1]} : vector<8x96xf32> to vector<8x32xf32>
    %47 = arith.addf %45, %46 : vector<8x32xf32>
    %48 = arith.negf %47 : vector<8x32xf32>
    %49 = math.exp %48 : vector<8x32xf32>
    %cst_15 = arith.constant 1.000000e+00 : f32
    %50 = vector.broadcast %cst_15 : f32 to vector<8x32xf32>
    %51 = arith.addf %50, %49 : vector<8x32xf32>
    %52 = arith.divf %50, %51 : vector<8x32xf32>
    %53 = vector.extract_strided_slice %43 {offsets = [0, 32], sizes = [8, 32], strides = [1, 1]} : vector<8x96xf32> to vector<8x32xf32>
    %54 = vector.extract_strided_slice %44 {offsets = [0, 32], sizes = [8, 32], strides = [1, 1]} : vector<8x96xf32> to vector<8x32xf32>
    %55 = arith.addf %53, %54 : vector<8x32xf32>
    %56 = arith.negf %55 : vector<8x32xf32>
    %57 = math.exp %56 : vector<8x32xf32>
    %cst_16 = arith.constant 1.000000e+00 : f32
    %58 = vector.broadcast %cst_16 : f32 to vector<8x32xf32>
    %59 = arith.addf %58, %57 : vector<8x32xf32>
    %60 = arith.divf %58, %59 : vector<8x32xf32>
    %61 = vector.extract_strided_slice %43 {offsets = [0, 64], sizes = [8, 32], strides = [1, 1]} : vector<8x96xf32> to vector<8x32xf32>
    %62 = vector.extract_strided_slice %44 {offsets = [0, 64], sizes = [8, 32], strides = [1, 1]} : vector<8x96xf32> to vector<8x32xf32>
    %63 = vector.broadcast %5 : vector<1x32xf32> to vector<8x32xf32>
    %64 = arith.addf %62, %63 : vector<8x32xf32>
    %65 = arith.mulf %52, %64 : vector<8x32xf32>
    %66 = arith.addf %61, %65 : vector<8x32xf32>
    %67 = math.tanh %66 : vector<8x32xf32>
    %cst_17 = arith.constant 1.000000e+00 : f32
    %68 = vector.broadcast %cst_17 : f32 to vector<8x32xf32>
    %69 = arith.subf %68, %60 : vector<8x32xf32>
    %70 = arith.mulf %69, %67 : vector<8x32xf32>
    %71 = arith.mulf %60, %42 : vector<8x32xf32>
    %72 = arith.addf %70, %71 : vector<8x32xf32>
    %73 = vector.extract_strided_slice %11 {offsets = [16, 0], sizes = [8, 96], strides = [1, 1]} : vector<64x96xf32> to vector<8x96xf32>
    %cst_18 = arith.constant dense<0.000000e+00> : vector<8x96xf32>
    %74 = tpu.matmul %72, %2, %cst_18 {dimension_numbers = #tpu.dot_dimension_numbers<[1], [0], [0], [1], [0, 0, 1, 1], [], []>} : vector<8x32xf32>, vector<32x96xf32>, vector<8x96xf32> -> vector<8x96xf32>
    %75 = vector.extract_strided_slice %73 {offsets = [0, 0], sizes = [8, 32], strides = [1, 1]} : vector<8x96xf32> to vector<8x32xf32>
    %76 = vector.extract_strided_slice %74 {offsets = [0, 0], sizes = [8, 32], strides = [1, 1]} : vector<8x96xf32> to vector<8x32xf32>
    %77 = arith.addf %75, %76 : vector<8x32xf32>
    %78 = arith.negf %77 : vector<8x32xf32>
    %79 = math.exp %78 : vector<8x32xf32>
    %cst_19 = arith.constant 1.000000e+00 : f32
    %80 = vector.broadcast %cst_19 : f32 to vector<8x32xf32>
    %81 = arith.addf %80, %79 : vector<8x32xf32>
    %82 = arith.divf %80, %81 : vector<8x32xf32>
    %83 = vector.extract_strided_slice %73 {offsets = [0, 32], sizes = [8, 32], strides = [1, 1]} : vector<8x96xf32> to vector<8x32xf32>
    %84 = vector.extract_strided_slice %74 {offsets = [0, 32], sizes = [8, 32], strides = [1, 1]} : vector<8x96xf32> to vector<8x32xf32>
    %85 = arith.addf %83, %84 : vector<8x32xf32>
    %86 = arith.negf %85 : vector<8x32xf32>
    %87 = math.exp %86 : vector<8x32xf32>
    %cst_20 = arith.constant 1.000000e+00 : f32
    %88 = vector.broadcast %cst_20 : f32 to vector<8x32xf32>
    %89 = arith.addf %88, %87 : vector<8x32xf32>
    %90 = arith.divf %88, %89 : vector<8x32xf32>
    %91 = vector.extract_strided_slice %73 {offsets = [0, 64], sizes = [8, 32], strides = [1, 1]} : vector<8x96xf32> to vector<8x32xf32>
    %92 = vector.extract_strided_slice %74 {offsets = [0, 64], sizes = [8, 32], strides = [1, 1]} : vector<8x96xf32> to vector<8x32xf32>
    %93 = vector.broadcast %5 : vector<1x32xf32> to vector<8x32xf32>
    %94 = arith.addf %92, %93 : vector<8x32xf32>
    %95 = arith.mulf %82, %94 : vector<8x32xf32>
    %96 = arith.addf %91, %95 : vector<8x32xf32>
    %97 = math.tanh %96 : vector<8x32xf32>
    %cst_21 = arith.constant 1.000000e+00 : f32
    %98 = vector.broadcast %cst_21 : f32 to vector<8x32xf32>
    %99 = arith.subf %98, %90 : vector<8x32xf32>
    %100 = arith.mulf %99, %97 : vector<8x32xf32>
    %101 = arith.mulf %90, %72 : vector<8x32xf32>
    %102 = arith.addf %100, %101 : vector<8x32xf32>
    %103 = vector.extract_strided_slice %11 {offsets = [24, 0], sizes = [8, 96], strides = [1, 1]} : vector<64x96xf32> to vector<8x96xf32>
    %cst_22 = arith.constant dense<0.000000e+00> : vector<8x96xf32>
    %104 = tpu.matmul %102, %2, %cst_22 {dimension_numbers = #tpu.dot_dimension_numbers<[1], [0], [0], [1], [0, 0, 1, 1], [], []>} : vector<8x32xf32>, vector<32x96xf32>, vector<8x96xf32> -> vector<8x96xf32>
    %105 = vector.extract_strided_slice %103 {offsets = [0, 0], sizes = [8, 32], strides = [1, 1]} : vector<8x96xf32> to vector<8x32xf32>
    %106 = vector.extract_strided_slice %104 {offsets = [0, 0], sizes = [8, 32], strides = [1, 1]} : vector<8x96xf32> to vector<8x32xf32>
    %107 = arith.addf %105, %106 : vector<8x32xf32>
    %108 = arith.negf %107 : vector<8x32xf32>
    %109 = math.exp %108 : vector<8x32xf32>
    %cst_23 = arith.constant 1.000000e+00 : f32
    %110 = vector.broadcast %cst_23 : f32 to vector<8x32xf32>
    %111 = arith.addf %110, %109 : vector<8x32xf32>
    %112 = arith.divf %110, %111 : vector<8x32xf32>
    %113 = vector.extract_strided_slice %103 {offsets = [0, 32], sizes = [8, 32], strides = [1, 1]} : vector<8x96xf32> to vector<8x32xf32>
    %114 = vector.extract_strided_slice %104 {offsets = [0, 32], sizes = [8, 32], strides = [1, 1]} : vector<8x96xf32> to vector<8x32xf32>
    %115 = arith.addf %113, %114 : vector<8x32xf32>
    %116 = arith.negf %115 : vector<8x32xf32>
    %117 = math.exp %116 : vector<8x32xf32>
    %cst_24 = arith.constant 1.000000e+00 : f32
    %118 = vector.broadcast %cst_24 : f32 to vector<8x32xf32>
    %119 = arith.addf %118, %117 : vector<8x32xf32>
    %120 = arith.divf %118, %119 : vector<8x32xf32>
    %121 = vector.extract_strided_slice %103 {offsets = [0, 64], sizes = [8, 32], strides = [1, 1]} : vector<8x96xf32> to vector<8x32xf32>
    %122 = vector.extract_strided_slice %104 {offsets = [0, 64], sizes = [8, 32], strides = [1, 1]} : vector<8x96xf32> to vector<8x32xf32>
    %123 = vector.broadcast %5 : vector<1x32xf32> to vector<8x32xf32>
    %124 = arith.addf %122, %123 : vector<8x32xf32>
    %125 = arith.mulf %112, %124 : vector<8x32xf32>
    %126 = arith.addf %121, %125 : vector<8x32xf32>
    %127 = math.tanh %126 : vector<8x32xf32>
    %cst_25 = arith.constant 1.000000e+00 : f32
    %128 = vector.broadcast %cst_25 : f32 to vector<8x32xf32>
    %129 = arith.subf %128, %120 : vector<8x32xf32>
    %130 = arith.mulf %129, %127 : vector<8x32xf32>
    %131 = arith.mulf %120, %102 : vector<8x32xf32>
    %132 = arith.addf %130, %131 : vector<8x32xf32>
    %133 = vector.extract_strided_slice %11 {offsets = [32, 0], sizes = [8, 96], strides = [1, 1]} : vector<64x96xf32> to vector<8x96xf32>
    %cst_26 = arith.constant dense<0.000000e+00> : vector<8x96xf32>
    %134 = tpu.matmul %132, %2, %cst_26 {dimension_numbers = #tpu.dot_dimension_numbers<[1], [0], [0], [1], [0, 0, 1, 1], [], []>} : vector<8x32xf32>, vector<32x96xf32>, vector<8x96xf32> -> vector<8x96xf32>
    %135 = vector.extract_strided_slice %133 {offsets = [0, 0], sizes = [8, 32], strides = [1, 1]} : vector<8x96xf32> to vector<8x32xf32>
    %136 = vector.extract_strided_slice %134 {offsets = [0, 0], sizes = [8, 32], strides = [1, 1]} : vector<8x96xf32> to vector<8x32xf32>
    %137 = arith.addf %135, %136 : vector<8x32xf32>
    %138 = arith.negf %137 : vector<8x32xf32>
    %139 = math.exp %138 : vector<8x32xf32>
    %cst_27 = arith.constant 1.000000e+00 : f32
    %140 = vector.broadcast %cst_27 : f32 to vector<8x32xf32>
    %141 = arith.addf %140, %139 : vector<8x32xf32>
    %142 = arith.divf %140, %141 : vector<8x32xf32>
    %143 = vector.extract_strided_slice %133 {offsets = [0, 32], sizes = [8, 32], strides = [1, 1]} : vector<8x96xf32> to vector<8x32xf32>
    %144 = vector.extract_strided_slice %134 {offsets = [0, 32], sizes = [8, 32], strides = [1, 1]} : vector<8x96xf32> to vector<8x32xf32>
    %145 = arith.addf %143, %144 : vector<8x32xf32>
    %146 = arith.negf %145 : vector<8x32xf32>
    %147 = math.exp %146 : vector<8x32xf32>
    %cst_28 = arith.constant 1.000000e+00 : f32
    %148 = vector.broadcast %cst_28 : f32 to vector<8x32xf32>
    %149 = arith.addf %148, %147 : vector<8x32xf32>
    %150 = arith.divf %148, %149 : vector<8x32xf32>
    %151 = vector.extract_strided_slice %133 {offsets = [0, 64], sizes = [8, 32], strides = [1, 1]} : vector<8x96xf32> to vector<8x32xf32>
    %152 = vector.extract_strided_slice %134 {offsets = [0, 64], sizes = [8, 32], strides = [1, 1]} : vector<8x96xf32> to vector<8x32xf32>
    %153 = vector.broadcast %5 : vector<1x32xf32> to vector<8x32xf32>
    %154 = arith.addf %152, %153 : vector<8x32xf32>
    %155 = arith.mulf %142, %154 : vector<8x32xf32>
    %156 = arith.addf %151, %155 : vector<8x32xf32>
    %157 = math.tanh %156 : vector<8x32xf32>
    %cst_29 = arith.constant 1.000000e+00 : f32
    %158 = vector.broadcast %cst_29 : f32 to vector<8x32xf32>
    %159 = arith.subf %158, %150 : vector<8x32xf32>
    %160 = arith.mulf %159, %157 : vector<8x32xf32>
    %161 = arith.mulf %150, %132 : vector<8x32xf32>
    %162 = arith.addf %160, %161 : vector<8x32xf32>
    %163 = vector.extract_strided_slice %11 {offsets = [40, 0], sizes = [8, 96], strides = [1, 1]} : vector<64x96xf32> to vector<8x96xf32>
    %cst_30 = arith.constant dense<0.000000e+00> : vector<8x96xf32>
    %164 = tpu.matmul %162, %2, %cst_30 {dimension_numbers = #tpu.dot_dimension_numbers<[1], [0], [0], [1], [0, 0, 1, 1], [], []>} : vector<8x32xf32>, vector<32x96xf32>, vector<8x96xf32> -> vector<8x96xf32>
    %165 = vector.extract_strided_slice %163 {offsets = [0, 0], sizes = [8, 32], strides = [1, 1]} : vector<8x96xf32> to vector<8x32xf32>
    %166 = vector.extract_strided_slice %164 {offsets = [0, 0], sizes = [8, 32], strides = [1, 1]} : vector<8x96xf32> to vector<8x32xf32>
    %167 = arith.addf %165, %166 : vector<8x32xf32>
    %168 = arith.negf %167 : vector<8x32xf32>
    %169 = math.exp %168 : vector<8x32xf32>
    %cst_31 = arith.constant 1.000000e+00 : f32
    %170 = vector.broadcast %cst_31 : f32 to vector<8x32xf32>
    %171 = arith.addf %170, %169 : vector<8x32xf32>
    %172 = arith.divf %170, %171 : vector<8x32xf32>
    %173 = vector.extract_strided_slice %163 {offsets = [0, 32], sizes = [8, 32], strides = [1, 1]} : vector<8x96xf32> to vector<8x32xf32>
    %174 = vector.extract_strided_slice %164 {offsets = [0, 32], sizes = [8, 32], strides = [1, 1]} : vector<8x96xf32> to vector<8x32xf32>
    %175 = arith.addf %173, %174 : vector<8x32xf32>
    %176 = arith.negf %175 : vector<8x32xf32>
    %177 = math.exp %176 : vector<8x32xf32>
    %cst_32 = arith.constant 1.000000e+00 : f32
    %178 = vector.broadcast %cst_32 : f32 to vector<8x32xf32>
    %179 = arith.addf %178, %177 : vector<8x32xf32>
    %180 = arith.divf %178, %179 : vector<8x32xf32>
    %181 = vector.extract_strided_slice %163 {offsets = [0, 64], sizes = [8, 32], strides = [1, 1]} : vector<8x96xf32> to vector<8x32xf32>
    %182 = vector.extract_strided_slice %164 {offsets = [0, 64], sizes = [8, 32], strides = [1, 1]} : vector<8x96xf32> to vector<8x32xf32>
    %183 = vector.broadcast %5 : vector<1x32xf32> to vector<8x32xf32>
    %184 = arith.addf %182, %183 : vector<8x32xf32>
    %185 = arith.mulf %172, %184 : vector<8x32xf32>
    %186 = arith.addf %181, %185 : vector<8x32xf32>
    %187 = math.tanh %186 : vector<8x32xf32>
    %cst_33 = arith.constant 1.000000e+00 : f32
    %188 = vector.broadcast %cst_33 : f32 to vector<8x32xf32>
    %189 = arith.subf %188, %180 : vector<8x32xf32>
    %190 = arith.mulf %189, %187 : vector<8x32xf32>
    %191 = arith.mulf %180, %162 : vector<8x32xf32>
    %192 = arith.addf %190, %191 : vector<8x32xf32>
    %193 = vector.extract_strided_slice %11 {offsets = [48, 0], sizes = [8, 96], strides = [1, 1]} : vector<64x96xf32> to vector<8x96xf32>
    %cst_34 = arith.constant dense<0.000000e+00> : vector<8x96xf32>
    %194 = tpu.matmul %192, %2, %cst_34 {dimension_numbers = #tpu.dot_dimension_numbers<[1], [0], [0], [1], [0, 0, 1, 1], [], []>} : vector<8x32xf32>, vector<32x96xf32>, vector<8x96xf32> -> vector<8x96xf32>
    %195 = vector.extract_strided_slice %193 {offsets = [0, 0], sizes = [8, 32], strides = [1, 1]} : vector<8x96xf32> to vector<8x32xf32>
    %196 = vector.extract_strided_slice %194 {offsets = [0, 0], sizes = [8, 32], strides = [1, 1]} : vector<8x96xf32> to vector<8x32xf32>
    %197 = arith.addf %195, %196 : vector<8x32xf32>
    %198 = arith.negf %197 : vector<8x32xf32>
    %199 = math.exp %198 : vector<8x32xf32>
    %cst_35 = arith.constant 1.000000e+00 : f32
    %200 = vector.broadcast %cst_35 : f32 to vector<8x32xf32>
    %201 = arith.addf %200, %199 : vector<8x32xf32>
    %202 = arith.divf %200, %201 : vector<8x32xf32>
    %203 = vector.extract_strided_slice %193 {offsets = [0, 32], sizes = [8, 32], strides = [1, 1]} : vector<8x96xf32> to vector<8x32xf32>
    %204 = vector.extract_strided_slice %194 {offsets = [0, 32], sizes = [8, 32], strides = [1, 1]} : vector<8x96xf32> to vector<8x32xf32>
    %205 = arith.addf %203, %204 : vector<8x32xf32>
    %206 = arith.negf %205 : vector<8x32xf32>
    %207 = math.exp %206 : vector<8x32xf32>
    %cst_36 = arith.constant 1.000000e+00 : f32
    %208 = vector.broadcast %cst_36 : f32 to vector<8x32xf32>
    %209 = arith.addf %208, %207 : vector<8x32xf32>
    %210 = arith.divf %208, %209 : vector<8x32xf32>
    %211 = vector.extract_strided_slice %193 {offsets = [0, 64], sizes = [8, 32], strides = [1, 1]} : vector<8x96xf32> to vector<8x32xf32>
    %212 = vector.extract_strided_slice %194 {offsets = [0, 64], sizes = [8, 32], strides = [1, 1]} : vector<8x96xf32> to vector<8x32xf32>
    %213 = vector.broadcast %5 : vector<1x32xf32> to vector<8x32xf32>
    %214 = arith.addf %212, %213 : vector<8x32xf32>
    %215 = arith.mulf %202, %214 : vector<8x32xf32>
    %216 = arith.addf %211, %215 : vector<8x32xf32>
    %217 = math.tanh %216 : vector<8x32xf32>
    %cst_37 = arith.constant 1.000000e+00 : f32
    %218 = vector.broadcast %cst_37 : f32 to vector<8x32xf32>
    %219 = arith.subf %218, %210 : vector<8x32xf32>
    %220 = arith.mulf %219, %217 : vector<8x32xf32>
    %221 = arith.mulf %210, %192 : vector<8x32xf32>
    %222 = arith.addf %220, %221 : vector<8x32xf32>
    %223 = vector.extract_strided_slice %11 {offsets = [56, 0], sizes = [8, 96], strides = [1, 1]} : vector<64x96xf32> to vector<8x96xf32>
    %cst_38 = arith.constant dense<0.000000e+00> : vector<8x96xf32>
    %224 = tpu.matmul %222, %2, %cst_38 {dimension_numbers = #tpu.dot_dimension_numbers<[1], [0], [0], [1], [0, 0, 1, 1], [], []>} : vector<8x32xf32>, vector<32x96xf32>, vector<8x96xf32> -> vector<8x96xf32>
    %225 = vector.extract_strided_slice %223 {offsets = [0, 0], sizes = [8, 32], strides = [1, 1]} : vector<8x96xf32> to vector<8x32xf32>
    %226 = vector.extract_strided_slice %224 {offsets = [0, 0], sizes = [8, 32], strides = [1, 1]} : vector<8x96xf32> to vector<8x32xf32>
    %227 = arith.addf %225, %226 : vector<8x32xf32>
    %228 = arith.negf %227 : vector<8x32xf32>
    %229 = math.exp %228 : vector<8x32xf32>
    %cst_39 = arith.constant 1.000000e+00 : f32
    %230 = vector.broadcast %cst_39 : f32 to vector<8x32xf32>
    %231 = arith.addf %230, %229 : vector<8x32xf32>
    %232 = arith.divf %230, %231 : vector<8x32xf32>
    %233 = vector.extract_strided_slice %223 {offsets = [0, 32], sizes = [8, 32], strides = [1, 1]} : vector<8x96xf32> to vector<8x32xf32>
    %234 = vector.extract_strided_slice %224 {offsets = [0, 32], sizes = [8, 32], strides = [1, 1]} : vector<8x96xf32> to vector<8x32xf32>
    %235 = arith.addf %233, %234 : vector<8x32xf32>
    %236 = arith.negf %235 : vector<8x32xf32>
    %237 = math.exp %236 : vector<8x32xf32>
    %cst_40 = arith.constant 1.000000e+00 : f32
    %238 = vector.broadcast %cst_40 : f32 to vector<8x32xf32>
    %239 = arith.addf %238, %237 : vector<8x32xf32>
    %240 = arith.divf %238, %239 : vector<8x32xf32>
    %241 = vector.extract_strided_slice %223 {offsets = [0, 64], sizes = [8, 32], strides = [1, 1]} : vector<8x96xf32> to vector<8x32xf32>
    %242 = vector.extract_strided_slice %224 {offsets = [0, 64], sizes = [8, 32], strides = [1, 1]} : vector<8x96xf32> to vector<8x32xf32>
    %243 = vector.broadcast %5 : vector<1x32xf32> to vector<8x32xf32>
    %244 = arith.addf %242, %243 : vector<8x32xf32>
    %245 = arith.mulf %232, %244 : vector<8x32xf32>
    %246 = arith.addf %241, %245 : vector<8x32xf32>
    %247 = math.tanh %246 : vector<8x32xf32>
    %cst_41 = arith.constant 1.000000e+00 : f32
    %248 = vector.broadcast %cst_41 : f32 to vector<8x32xf32>
    %249 = arith.subf %248, %240 : vector<8x32xf32>
    %250 = arith.mulf %249, %247 : vector<8x32xf32>
    %251 = arith.mulf %240, %222 : vector<8x32xf32>
    %252 = arith.addf %250, %251 : vector<8x32xf32>
    %cst_42 = arith.constant dense<0.000000e+00> : vector<8x8xf32>
    %253 = tpu.matmul %252, %7, %cst_42 {dimension_numbers = #tpu.dot_dimension_numbers<[1], [0], [0], [1], [0, 0, 1, 1], [], []>} : vector<8x32xf32>, vector<32x8xf32>, vector<8x8xf32> -> vector<8x8xf32>
    %254 = vector.broadcast %8 : vector<1x8xf32> to vector<8x8xf32>
    %255 = arith.addf %253, %254 : vector<8x8xf32>
    %256 = vector.extract_strided_slice %255 {offsets = [0, 0], sizes = [2, 8], strides = [1, 1]} : vector<8x8xf32> to vector<2x8xf32>
    %c0_43 = arith.constant 0 : index
    %c0_44 = arith.constant 0 : index
    %257 = vector.load %arg5[%c0_43, %c0_44] : memref<2x8xf32, #tpu.memory_space<vmem>>, vector<2x8xf32>
    tpu.vector_store %arg5[%c0_43, %c0_44], %256 {strides = array<i32>} : memref<2x8xf32, #tpu.memory_space<vmem>>, vector<2x8xf32>,
    return
  }
}

</mosaic_0001>

<llo_original>
// kernel: tpu_custom_call.1
$region0: #{tpu_custom_call.1}
  #allocation0 [shape = 'u32[]', space=smem, size = 0x4, offset = 0x4, fixed_abs, tag = 'smem constant byte address 0x4 - core index']
  #allocation1 [shape = 'u32[144,128]{1,0:T(1,128)}', space=vmem, size = 0x12000, scoped, tag = 'internal scratch']
  %s0 = inlined_call_operand.vmem [shape: f32[64,4], index: 0, kind: input, shape index: {}]
  %s1 = inlined_call_operand.vmem [shape: f32[4,96], index: 1, kind: input, shape index: {}]
  %s2 = inlined_call_operand.vmem [shape: f32[32,96], index: 2, kind: input, shape index: {}]
  %s3 = inlined_call_operand.vmem [shape: f32[1,128], index: 3, kind: input, shape index: {}]
  %s4 = inlined_call_operand.vmem [shape: f32[33,8], index: 4, kind: input, shape index: {}]
  %s5 = inlined_call_operand.hbm [shape: f32[2,8], index: 5, kind: output, shape index: {}]
  %s6 = sld [smem:[#allocation0]]
  $region30: #{tpu_custom_call.1} parent=0
    _
  %s8 = ssub.s32 1, %s6
  %s9 = scalar_select 0, %s8, %s6
  $region1: #{tpu_custom_call.1} parent=0
    #allocation2 [shape = 'u8[1024]{0}', space=vmem, size = 0x400, scoped, tag = 'output window, operand 0, single buffered']
    #allocation3 [shape = 's32[1]{0}', space=sflag, size = 0x4, scoped, tag = 'scoped memory for tpu_custom_call.1']
    %10 = vsyncpa [#allocation3], 0
    // Predicated region
    $region2: #{tpu_custom_call.1} parent=1 // pred_check
      _
    $region3: #{tpu_custom_call.1} parent=1 // pred_check_branch
      %12 = sbr.rel (0) target = $region5
    $region4: #{tpu_custom_call.1} parent=1 // pred_region
      _
    $region5: #{tpu_custom_call.1} parent=1 // pred_fallthru
      _
    // Predicated region
    $region6: #{tpu_custom_call.1} parent=1 // pred_check
      _
    $region7: #{tpu_custom_call.1} parent=1 // pred_check_branch
      %14 = sbr.rel (0) target = $region9
    $region8: #{tpu_custom_call.1} parent=1 // pred_region
      _
    $region9: #{tpu_custom_call.1} parent=1 // pred_fallthru
      _
    // Predicated region
    $region10: #{tpu_custom_call.1} parent=1 // pred_check
      _
    $region11: #{tpu_custom_call.1} parent=1 // pred_check_branch
      %16 = sbr.rel (0) target = $region13
    $region12: #{tpu_custom_call.1} parent=1 // pred_region
      _
    $region13: #{tpu_custom_call.1} parent=1 // pred_fallthru
      _
    // Predicated region
    $region14: #{tpu_custom_call.1} parent=1 // pred_check
      _
    $region15: #{tpu_custom_call.1} parent=1 // pred_check_branch
      %18 = sbr.rel (0) target = $region17
    $region16: #{tpu_custom_call.1} parent=1 // pred_region
      _
    $region17: #{tpu_custom_call.1} parent=1 // pred_fallthru
      _
    // Predicated region
    $region18: #{tpu_custom_call.1} parent=1 // pred_check
      _
    $region19: #{tpu_custom_call.1} parent=1 // pred_check_branch
      %20 = sbr.rel (0) target = $region21
    $region20: #{tpu_custom_call.1} parent=1 // pred_region
      _
    $region21: #{tpu_custom_call.1} parent=1 // pred_fallthru
      _
    %v21 = vld [vmem:[%s0] sm:$0xff]
    %v22 = vld [vmem:[%s0 + $0x8] sm:$0xff]
    %v23 = vld [vmem:[%s0 + $0x10] sm:$0xff]
    %v24 = vld [vmem:[%s0 + $0x18] sm:$0xff]
    %v25 = vld [vmem:[%s0 + $0x20] sm:$0xff]
    %v26 = vld [vmem:[%s0 + $0x28] sm:$0xff]
    %v27 = vld [vmem:[%s0 + $0x30] sm:$0xff]
    %v28 = vld [vmem:[%s0 + $0x38] sm:$0xff]
    %v29 = vld [vmem:[%s1] sm:$0xf]
    %v30 = vld [vmem:[%s2] sm:$0xff]
    %v31 = vld [vmem:[%s2 + $0x8] sm:$0xff]
    %v32 = vld [vmem:[%s2 + $0x10] sm:$0xff]
    %v33 = vld [vmem:[%s2 + $0x18] sm:$0xff]
    %v34 = vld [vmem:[%s3] sm:$0x1]
    %v35 = vld [vmem:[%s4] sm:$0xff]
    %v36 = vld [vmem:[%s4 + $0x8] sm:$0xff]
    %v37 = vld [vmem:[%s4 + $0x10] sm:$0xff]
    %v38 = vld [vmem:[%s4 + $0x18] sm:$0xff]
    %v39 = vld [vmem:[%s4 + $0x20] sm:$0x1]
    %v41 = vlaneseq
    %v42 = vshrl.u32 %v41, 7
    %v43 = vsub.s32 0, %v42
    %v44 = vrot.slane %v34, %v43
    %vm46 = vcmask 31744
    %v48 = vsel %vm46, %v21, 0
    %v51 = vsel %vm46, %v22, 0
    %v54 = vsel %vm46, %v23, 0
    %v57 = vsel %vm46, %v24, 0
    %v60 = vsel %vm46, %v25, 0
    %v63 = vsel %vm46, %v26, 0
    %v66 = vsel %vm46, %v27, 0
    %v69 = vsel %vm46, %v28, 0
    %vm71 = vcmask 1043456
    %v73 = vsel %vm71, %v29, 0
    %75 = vmatprep.subr.mxu0 0.0
    %76 = vmatpush1.msra.mxu0 %v73
    %77 = vmatprep.subr.mxu0 0.0
    %78 = vmatpush1.msra.mxu0 0.0
    %79 = vmatprep.subr.mxu0 0.0
    %80 = vmatpush1.msra.mxu0 0.0
    %81 = vmatprep.subr.mxu0 0.0
    %82 = vmatpush1.msra.mxu0 0.0
    %83 = vmatprep.subr.mxu0 0.0
    %84 = vmatpush1.msra.mxu0 0.0
    %85 = vmatprep.subr.mxu0 0.0
    %86 = vmatpush1.msra.mxu0 0.0
    %87 = vmatprep.subr.mxu0 0.0
    %88 = vmatpush1.msra.mxu0 0.0
    %89 = vmatprep.subr.mxu0 0.0
    %90 = vmatpush1.msra.mxu0 0.0
    %91 = vmatprep.subr.mxu0 0.0
    %92 = vmatpush1.msra.mxu0 0.0
    %93 = vmatprep.subr.mxu0 0.0
    %94 = vmatpush1.msra.mxu0 0.0
    %95 = vmatprep.subr.mxu0 0.0
    %96 = vmatpush1.msra.mxu0 0.0
    %97 = vmatprep.subr.mxu0 0.0
    %98 = vmatpush1.msra.mxu0 0.0
    %99 = vmatprep.subr.mxu0 0.0
    %100 = vmatpush1.msra.mxu0 0.0
    %101 = vmatprep.subr.mxu0 0.0
    %102 = vmatpush1.msra.mxu0 0.0
    %103 = vmatprep.subr.mxu0 0.0
    %104 = vmatpush1.msra.mxu0 0.0
    %105 = vmatprep.subr.mxu0 0.0
    %106 = vmatpush1.msra.mxu0 0.0
    %107 = vmatprep.subr.mxu0 0.0
    %108 = vmatpush1.msra.mxu0 0.0
    %109 = vmatprep.subr.mxu0 0.0
    %110 = vmatpush1.msra.mxu0 0.0
    %111 = vmatprep.subr.mxu0 0.0
    %112 = vmatpush1.msra.mxu0 0.0
    %113 = vmatprep.subr.mxu0 0.0
    %114 = vmatpush1.msra.mxu0 0.0
    %115 = vmatprep.subr.mxu0 0.0
    %116 = vmatpush1.msra.mxu0 0.0
    %117 = vmatprep.subr.mxu0 0.0
    %118 = vmatpush1.msra.mxu0 0.0
    %119 = vmatprep.subr.mxu0 0.0
    %120 = vmatpush1.msra.mxu0 0.0
    %121 = vmatprep.subr.mxu0 0.0
    %122 = vmatpush1.msra.mxu0 0.0
    %123 = vmatprep.subr.mxu0 0.0
    %124 = vmatpush1.msra.mxu0 0.0
    %125 = vmatprep.subr.mxu0 0.0
    %126 = vmatpush1.msra.mxu0 0.0
    %127 = vmatprep.subr.mxu0 0.0
    %128 = vmatpush1.msra.mxu0 0.0
    %129 = vmatprep.subr.mxu0 0.0
    %130 = vmatpush1.msra.mxu0 0.0
    %131 = vmatprep.subr.mxu0 0.0
    %132 = vmatpush1.msra.mxu0 0.0
    %133 = vmatprep.subr.mxu0 0.0
    %134 = vmatpush1.msra.mxu0 0.0
    %135 = vmatprep.subr.mxu0 0.0
    %136 = vmatpush1.msra.mxu0 0.0
    %137 = vmatprep.subr.mxu0 0.0
    %138 = vmatpush1.msra.mxu0 0.0
    %139 = vmatprep.mubr.f32.mxu0 0.0
    %140 = vmatmul.mubr.f32.gmra.mrb[0].mxu0 %v48
    %v141 = vpop.f32.mrb[0].mxu0
    %v142 = vadd.f32 %v44, %v141
    %v143 = vpop.f32.mrb[0].mxu0
    %144 = vmatprep.mubr.f32.mxu0 0.0
    %145 = vmatmul.mubr.f32.gmra.mrb[0].mxu0 %v51
    %v146 = vpop.f32.mrb[0].mxu0
    %v147 = vadd.f32 %v44, %v146
    %v148 = vpop.f32.mrb[0].mxu0
    %149 = vmatprep.mubr.f32.mxu0 0.0
    %150 = vmatmul.mubr.f32.gmra.mrb[0].mxu0 %v54
    %v151 = vpop.f32.mrb[0].mxu0
    %v152 = vadd.f32 %v44, %v151
    %v153 = vpop.f32.mrb[0].mxu0
    %154 = vmatprep.mubr.f32.mxu0 0.0
    %155 = vmatmul.mubr.f32.gmra.mrb[0].mxu0 %v57
    %v156 = vpop.f32.mrb[0].mxu0
    %v157 = vadd.f32 %v44, %v156
    %v158 = vpop.f32.mrb[0].mxu0
    %159 = vmatprep.mubr.f32.mxu0 0.0
    %160 = vmatmul.mubr.f32.gmra.mrb[0].mxu0 %v60
    %v161 = vpop.f32.mrb[0].mxu0
    %v162 = vadd.f32 %v44, %v161
    %v163 = vpop.f32.mrb[0].mxu0
    %164 = vmatprep.mubr.f32.mxu0 0.0
    %165 = vmatmul.mubr.f32.gmra.mrb[0].mxu0 %v63
    %v166 = vpop.f32.mrb[0].mxu0
    %v167 = vadd.f32 %v44, %v166
    %v168 = vpop.f32.mrb[0].mxu0
    %169 = vmatprep.mubr.f32.mxu0 0.0
    %170 = vmatmul.mubr.f32.gmra.mrb[0].mxu0 %v66
    %v171 = vpop.f32.mrb[0].mxu0
    %v172 = vadd.f32 %v44, %v171
    %v173 = vpop.f32.mrb[0].mxu0
    %174 = vmatprep.mubr.f32.mxu0 0.0
    %175 = vmatmul.mubr.f32.gmra.mrb[0].mxu0 %v69
    %v176 = vpop.f32.mrb[0].mxu0
    %v177 = vadd.f32 %v44, %v176
    %v178 = vpop.f32.mrb[0].mxu0
    %179 = vdwg.mxu0
    %vm180 = vcmask 261120
    %v182 = vsel %vm180, 0.0, 0
    %184 = vmatprep.subr.mxu0 0.0
    %185 = vmatpush1.msra.mxu0 %v30
    %186 = vmatprep.subr.mxu0 0.0
    %187 = vmatpush1.msra.mxu0 %v31
    %188 = vmatprep.subr.mxu0 0.0
    %189 = vmatpush1.msra.mxu0 %v32
    %190 = vmatprep.subr.mxu0 0.0
    %191 = vmatpush1.msra.mxu0 %v33
    %192 = vmatprep.subr.mxu0 0.0
    %193 = vmatpush1.msra.mxu0 0.0
    %194 = vmatprep.subr.mxu0 0.0
    %195 = vmatpush1.msra.mxu0 0.0
    %196 = vmatprep.subr.mxu0 0.0
    %197 = vmatpush1.msra.mxu0 0.0
    %198 = vmatprep.subr.mxu0 0.0
    %199 = vmatpush1.msra.mxu0 0.0
    %200 = vmatprep.subr.mxu0 0.0
    %201 = vmatpush1.msra.mxu0 0.0
    %202 = vmatprep.subr.mxu0 0.0
    %203 = vmatpush1.msra.mxu0 0.0
    %204 = vmatprep.subr.mxu0 0.0
    %205 = vmatpush1.msra.mxu0 0.0
    %206 = vmatprep.subr.mxu0 0.0
    %207 = vmatpush1.msra.mxu0 0.0
    %208 = vmatprep.subr.mxu0 0.0
    %209 = vmatpush1.msra.mxu0 0.0
    %210 = vmatprep.subr.mxu0 0.0
    %211 = vmatpush1.msra.mxu0 0.0
    %212 = vmatprep.subr.mxu0 0.0
    %213 = vmatpush1.msra.mxu0 0.0
    %214 = vmatprep.subr.mxu0 0.0
    %215 = vmatpush1.msra.mxu0 0.0
    %216 = vmatprep.subr.mxu0 0.0
    %217 = vmatpush1.msra.mxu0 0.0
    %218 = vmatprep.subr.mxu0 0.0
    %219 = vmatpush1.msra.mxu0 0.0
    %220 = vmatprep.subr.mxu0 0.0
    %221 = vmatpush1.msra.mxu0 0.0
    %222 = vmatprep.subr.mxu0 0.0
    %223 = vmatpush1.msra.mxu0 0.0
    %224 = vmatprep.subr.mxu0 0.0
    %225 = vmatpush1.msra.mxu0 0.0
    %226 = vmatprep.subr.mxu0 0.0
    %227 = vmatpush1.msra.mxu0 0.0
    %228 = vmatprep.subr.mxu0 0.0
    %229 = vmatpush1.msra.mxu0 0.0
    %230 = vmatprep.subr.mxu0 0.0
    %231 = vmatpush1.msra.mxu0 0.0
    %232 = vmatprep.subr.mxu0 0.0
    %233 = vmatpush1.msra.mxu0 0.0
    %234 = vmatprep.subr.mxu0 0.0
    %235 = vmatpush1.msra.mxu0 0.0
    %236 = vmatprep.subr.mxu0 0.0
    %237 = vmatpush1.msra.mxu0 0.0
    %238 = vmatprep.subr.mxu0 0.0
    %239 = vmatpush1.msra.mxu0 0.0
    %240 = vmatprep.subr.mxu0 0.0
    %241 = vmatpush1.msra.mxu0 0.0
    %242 = vmatprep.subr.mxu0 0.0
    %243 = vmatpush1.msra.mxu0 0.0
    %244 = vmatprep.subr.mxu0 0.0
    %245 = vmatpush1.msra.mxu0 0.0
    %246 = vmatprep.subr.mxu0 0.0
    %247 = vmatpush1.msra.mxu0 0.0
    %248 = vmatprep.mubr.f32.mxu0 0.0
    %249 = vmatmul.mubr.f32.gmra.mrb[0].mxu0 %v182
    %v250 = vpop.f32.mrb[0].mxu0
    %v251 = vadd.f32 0.0, %v250
    %v252 = vpop.f32.mrb[0].mxu0
    %253 = vdwg.mxu0
    %v254 = vadd.f32 %v142, %v251
    %v255 = vxor.u32 %v254, 2147483648
    %v256 = vmul.f32 %v255, 1.442695
    %v257 = vpow.pop %v256
    %v258 = vadd.f32 %v257, 1.0
    %v259 = vrcp.pop %v258
    %v260 = vmul.f32 1.0, %v259
    %261 = vrot.lane.b32.xlu0 %v44, 96
    %v262 = vpop.permute.xlu0 %261
    %v264 = vadd.f32 %v251, %v262
    %266 = vrot.lane.b32.xlu0 %v264, 64
    %v267 = vpop.permute.xlu0 %266
    %v269 = vmul.f32 %v260, %v267
    %271 = vrot.lane.b32.xlu0 %v269, 64
    %v272 = vpop.permute.xlu0 %271
    %v274 = vadd.f32 %v142, %v272
    %v275 = vtanh.pop %v274
    %v276 = vsub.f32 1.0, %v260
    %278 = vrot.lane.b32.xlu0 %v275, 96
    %v279 = vpop.permute.xlu0 %278
    %v281 = vmul.f32 %v276, %v279
    %v282 = vmul.f32 %v260, 0.0
    %v283 = vadd.f32 %v281, %v282
    %285 = vrot.lane.b32.xlu0 %v283, 96
    %v286 = vpop.permute.xlu0 %285
    %v287 = vsel %vm180, %v286, 0
    %289 = vmatprep.subr.mxu0 0.0
    %290 = vmatpush1.msra.mxu0 %v30
    %291 = vmatprep.subr.mxu0 0.0
    %292 = vmatpush1.msra.mxu0 %v31
    %293 = vmatprep.subr.mxu0 0.0
    %294 = vmatpush1.msra.mxu0 %v32
    %295 = vmatprep.subr.mxu0 0.0
    %296 = vmatpush1.msra.mxu0 %v33
    %297 = vmatprep.subr.mxu0 0.0
    %298 = vmatpush1.msra.mxu0 0.0
    %299 = vmatprep.subr.mxu0 0.0
    %300 = vmatpush1.msra.mxu0 0.0
    %301 = vmatprep.subr.mxu0 0.0
    %302 = vmatpush1.msra.mxu0 0.0
    %303 = vmatprep.subr.mxu0 0.0
    %304 = vmatpush1.msra.mxu0 0.0
    %305 = vmatprep.subr.mxu0 0.0
    %306 = vmatpush1.msra.mxu0 0.0
    %307 = vmatprep.subr.mxu0 0.0
    %308 = vmatpush1.msra.mxu0 0.0
    %309 = vmatprep.subr.mxu0 0.0
    %310 = vmatpush1.msra.mxu0 0.0
    %311 = vmatprep.subr.mxu0 0.0
    %312 = vmatpush1.msra.mxu0 0.0
    %313 = vmatprep.subr.mxu0 0.0
    %314 = vmatpush1.msra.mxu0 0.0
    %315 = vmatprep.subr.mxu0 0.0
    %316 = vmatpush1.msra.mxu0 0.0
    %317 = vmatprep.subr.mxu0 0.0
    %318 = vmatpush1.msra.mxu0 0.0
    %319 = vmatprep.subr.mxu0 0.0
    %320 = vmatpush1.msra.mxu0 0.0
    %321 = vmatprep.subr.mxu0 0.0
    %322 = vmatpush1.msra.mxu0 0.0
    %323 = vmatprep.subr.mxu0 0.0
    %324 = vmatpush1.msra.mxu0 0.0
    %325 = vmatprep.subr.mxu0 0.0
    %326 = vmatpush1.msra.mxu0 0.0
    %327 = vmatprep.subr.mxu0 0.0
    %328 = vmatpush1.msra.mxu0 0.0
    %329 = vmatprep.subr.mxu0 0.0
    %330 = vmatpush1.msra.mxu0 0.0
    %331 = vmatprep.subr.mxu0 0.0
    %332 = vmatpush1.msra.mxu0 0.0
    %333 = vmatprep.subr.mxu0 0.0
    %334 = vmatpush1.msra.mxu0 0.0
    %335 = vmatprep.subr.mxu0 0.0
    %336 = vmatpush1.msra.mxu0 0.0
    %337 = vmatprep.subr.mxu0 0.0
    %338 = vmatpush1.msra.mxu0 0.0
    %339 = vmatprep.subr.mxu0 0.0
    %340 = vmatpush1.msra.mxu0 0.0
    %341 = vmatprep.subr.mxu0 0.0
    %342 = vmatpush1.msra.mxu0 0.0
    %343 = vmatprep.subr.mxu0 0.0
    %344 = vmatpush1.msra.mxu0 0.0
    %345 = vmatprep.subr.mxu0 0.0
    %346 = vmatpush1.msra.mxu0 0.0
    %347 = vmatprep.subr.mxu0 0.0
    %348 = vmatpush1.msra.mxu0 0.0
    %349 = vmatprep.subr.mxu0 0.0
    %350 = vmatpush1.msra.mxu0 0.0
    %351 = vmatprep.subr.mxu0 0.0
    %352 = vmatpush1.msra.mxu0 0.0
    %353 = vmatprep.mubr.f32.mxu0 0.0
    %354 = vmatmul.mubr.f32.gmra.mrb[0].mxu0 %v287
    %v355 = vpop.f32.mrb[0].mxu0
    %v356 = vadd.f32 0.0, %v355
    %v357 = vpop.f32.mrb[0].mxu0
    %358 = vdwg.mxu0
    %v359 = vadd.f32 %v147, %v356
    %v360 = vxor.u32 %v359, 2147483648
    %v361 = vmul.f32 %v360, 1.442695
    %v362 = vpow.pop %v361
    %v363 = vadd.f32 %v362, 1.0
    %v364 = vrcp.pop %v363
    %v365 = vmul.f32 1.0, %v364
    %v366 = vadd.f32 %v356, %v262
    %368 = vrot.lane.b32.xlu0 %v366, 64
    %v369 = vpop.permute.xlu0 %368
    %v371 = vmul.f32 %v365, %v369
    %373 = vrot.lane.b32.xlu0 %v371, 64
    %v374 = vpop.permute.xlu0 %373
    %v376 = vadd.f32 %v147, %v374
    %v377 = vtanh.pop %v376
    %v378 = vsub.f32 1.0, %v365
    %380 = vrot.lane.b32.xlu0 %v377, 96
    %v381 = vpop.permute.xlu0 %380
    %v383 = vmul.f32 %v378, %v381
    %v384 = vmul.f32 %v365, %v283
    %v385 = vadd.f32 %v383, %v384
    %387 = vrot.lane.b32.xlu0 %v385, 96
    %v388 = vpop.permute.xlu0 %387
    %v389 = vsel %vm180, %v388, 0
    %391 = vmatprep.subr.mxu0 0.0
    %392 = vmatpush1.msra.mxu0 %v30
    %393 = vmatprep.subr.mxu0 0.0
    %394 = vmatpush1.msra.mxu0 %v31
    %395 = vmatprep.subr.mxu0 0.0
    %396 = vmatpush1.msra.mxu0 %v32
    %397 = vmatprep.subr.mxu0 0.0
    %398 = vmatpush1.msra.mxu0 %v33
    %399 = vmatprep.subr.mxu0 0.0
    %400 = vmatpush1.msra.mxu0 0.0
    %401 = vmatprep.subr.mxu0 0.0
    %402 = vmatpush1.msra.mxu0 0.0
    %403 = vmatprep.subr.mxu0 0.0
    %404 = vmatpush1.msra.mxu0 0.0
    %405 = vmatprep.subr.mxu0 0.0
    %406 = vmatpush1.msra.mxu0 0.0
    %407 = vmatprep.subr.mxu0 0.0
    %408 = vmatpush1.msra.mxu0 0.0
    %409 = vmatprep.subr.mxu0 0.0
    %410 = vmatpush1.msra.mxu0 0.0
    %411 = vmatprep.subr.mxu0 0.0
    %412 = vmatpush1.msra.mxu0 0.0
    %413 = vmatprep.subr.mxu0 0.0
    %414 = vmatpush1.msra.mxu0 0.0
    %415 = vmatprep.subr.mxu0 0.0
    %416 = vmatpush1.msra.mxu0 0.0
    %417 = vmatprep.subr.mxu0 0.0
    %418 = vmatpush1.msra.mxu0 0.0
    %419 = vmatprep.subr.mxu0 0.0
    %420 = vmatpush1.msra.mxu0 0.0
    %421 = vmatprep.subr.mxu0 0.0
    %422 = vmatpush1.msra.mxu0 0.0
    %423 = vmatprep.subr.mxu0 0.0
    %424 = vmatpush1.msra.mxu0 0.0
    %425 = vmatprep.subr.mxu0 0.0
    %426 = vmatpush1.msra.mxu0 0.0
    %427 = vmatprep.subr.mxu0 0.0
    %428 = vmatpush1.msra.mxu0 0.0
    %429 = vmatprep.subr.mxu0 0.0
    %430 = vmatpush1.msra.mxu0 0.0
    %431 = vmatprep.subr.mxu0 0.0
    %432 = vmatpush1.msra.mxu0 0.0
    %433 = vmatprep.subr.mxu0 0.0
    %434 = vmatpush1.msra.mxu0 0.0
    %435 = vmatprep.subr.mxu0 0.0
    %436 = vmatpush1.msra.mxu0 0.0
    %437 = vmatprep.subr.mxu0 0.0
    %438 = vmatpush1.msra.mxu0 0.0
    %439 = vmatprep.subr.mxu0 0.0
    %440 = vmatpush1.msra.mxu0 0.0
    %441 = vmatprep.subr.mxu0 0.0
    %442 = vmatpush1.msra.mxu0 0.0
    %443 = vmatprep.subr.mxu0 0.0
    %444 = vmatpush1.msra.mxu0 0.0
    %445 = vmatprep.subr.mxu0 0.0
    %446 = vmatpush1.msra.mxu0 0.0
    %447 = vmatprep.subr.mxu0 0.0
    %448 = vmatpush1.msra.mxu0 0.0
    %449 = vmatprep.subr.mxu0 0.0
    %450 = vmatpush1.msra.mxu0 0.0
    %451 = vmatprep.subr.mxu0 0.0
    %452 = vmatpush1.msra.mxu0 0.0
    %453 = vmatprep.subr.mxu0 0.0
    %454 = vmatpush1.msra.mxu0 0.0
    %455 = vmatprep.mubr.f32.mxu0 0.0
    %456 = vmatmul.mubr.f32.gmra.mrb[0].mxu0 %v389
    %v457 = vpop.f32.mrb[0].mxu0
    %v458 = vadd.f32 0.0, %v457
    %v459 = vpop.f32.mrb[0].mxu0
    %460 = vdwg.mxu0
    %v461 = vadd.f32 %v152, %v458
    %v462 = vxor.u32 %v461, 2147483648
    %v463 = vmul.f32 %v462, 1.442695
    %v464 = vpow.pop %v463
    %v465 = vadd.f32 %v464, 1.0
    %v466 = vrcp.pop %v465
    %v467 = vmul.f32 1.0, %v466
    %v468 = vadd.f32 %v458, %v262
    %470 = vrot.lane.b32.xlu0 %v468, 64
    %v471 = vpop.permute.xlu0 %470
    %v473 = vmul.f32 %v467, %v471
    %475 = vrot.lane.b32.xlu0 %v473, 64
    %v476 = vpop.permute.xlu0 %475
    %v478 = vadd.f32 %v152, %v476
    %v479 = vtanh.pop %v478
    %v480 = vsub.f32 1.0, %v467
    %482 = vrot.lane.b32.xlu0 %v479, 96
    %v483 = vpop.permute.xlu0 %482
    %v485 = vmul.f32 %v480, %v483
    %v486 = vmul.f32 %v467, %v385
    %v487 = vadd.f32 %v485, %v486
    %489 = vrot.lane.b32.xlu0 %v487, 96
    %v490 = vpop.permute.xlu0 %489
    %v491 = vsel %vm180, %v490, 0
    %493 = vmatprep.subr.mxu0 0.0
    %494 = vmatpush1.msra.mxu0 %v30
    %495 = vmatprep.subr.mxu0 0.0
    %496 = vmatpush1.msra.mxu0 %v31
    %497 = vmatprep.subr.mxu0 0.0
    %498 = vmatpush1.msra.mxu0 %v32
    %499 = vmatprep.subr.mxu0 0.0
    %500 = vmatpush1.msra.mxu0 %v33
    %501 = vmatprep.subr.mxu0 0.0
    %502 = vmatpush1.msra.mxu0 0.0
    %503 = vmatprep.subr.mxu0 0.0
    %504 = vmatpush1.msra.mxu0 0.0
    %505 = vmatprep.subr.mxu0 0.0
    %506 = vmatpush1.msra.mxu0 0.0
    %507 = vmatprep.subr.mxu0 0.0
    %508 = vmatpush1.msra.mxu0 0.0
    %509 = vmatprep.subr.mxu0 0.0
    %510 = vmatpush1.msra.mxu0 0.0
    %511 = vmatprep.subr.mxu0 0.0
    %512 = vmatpush1.msra.mxu0 0.0
    %513 = vmatprep.subr.mxu0 0.0
    %514 = vmatpush1.msra.mxu0 0.0
    %515 = vmatprep.subr.mxu0 0.0
    %516 = vmatpush1.msra.mxu0 0.0
    %517 = vmatprep.subr.mxu0 0.0
    %518 = vmatpush1.msra.mxu0 0.0
    %519 = vmatprep.subr.mxu0 0.0
    %520 = vmatpush1.msra.mxu0 0.0
    %521 = vmatprep.subr.mxu0 0.0
    %522 = vmatpush1.msra.mxu0 0.0
    %523 = vmatprep.subr.mxu0 0.0
    %524 = vmatpush1.msra.mxu0 0.0
    %525 = vmatprep.subr.mxu0 0.0
    %526 = vmatpush1.msra.mxu0 0.0
    %527 = vmatprep.subr.mxu0 0.0
    %528 = vmatpush1.msra.mxu0 0.0
    %529 = vmatprep.subr.mxu0 0.0
    %530 = vmatpush1.msra.mxu0 0.0
    %531 = vmatprep.subr.mxu0 0.0
    %532 = vmatpush1.msra.mxu0 0.0
    %533 = vmatprep.subr.mxu0 0.0
    %534 = vmatpush1.msra.mxu0 0.0
    %535 = vmatprep.subr.mxu0 0.0
    %536 = vmatpush1.msra.mxu0 0.0
    %537 = vmatprep.subr.mxu0 0.0
    %538 = vmatpush1.msra.mxu0 0.0
    %539 = vmatprep.subr.mxu0 0.0
    %540 = vmatpush1.msra.mxu0 0.0
    %541 = vmatprep.subr.mxu0 0.0
    %542 = vmatpush1.msra.mxu0 0.0
    %543 = vmatprep.subr.mxu0 0.0
    %544 = vmatpush1.msra.mxu0 0.0
    %545 = vmatprep.subr.mxu0 0.0
    %546 = vmatpush1.msra.mxu0 0.0
    %547 = vmatprep.subr.mxu0 0.0
    %548 = vmatpush1.msra.mxu0 0.0
    %549 = vmatprep.subr.mxu0 0.0
    %550 = vmatpush1.msra.mxu0 0.0
    %551 = vmatprep.subr.mxu0 0.0
    %552 = vmatpush1.msra.mxu0 0.0
    %553 = vmatprep.subr.mxu0 0.0
    %554 = vmatpush1.msra.mxu0 0.0
    %555 = vmatprep.subr.mxu0 0.0
    %556 = vmatpush1.msra.mxu0 0.0
    %557 = vmatprep.mubr.f32.mxu0 0.0
    %558 = vmatmul.mubr.f32.gmra.mrb[0].mxu0 %v491
    %v559 = vpop.f32.mrb[0].mxu0
    %v560 = vadd.f32 0.0, %v559
    %v561 = vpop.f32.mrb[0].mxu0
    %562 = vdwg.mxu0
    %v563 = vadd.f32 %v157, %v560
    %v564 = vxor.u32 %v563, 2147483648
    %v565 = vmul.f32 %v564, 1.442695
    %v566 = vpow.pop %v565
    %v567 = vadd.f32 %v566, 1.0
    %v568 = vrcp.pop %v567
    %v569 = vmul.f32 1.0, %v568
    %v570 = vadd.f32 %v560, %v262
    %572 = vrot.lane.b32.xlu0 %v570, 64
    %v573 = vpop.permute.xlu0 %572
    %v575 = vmul.f32 %v569, %v573
    %577 = vrot.lane.b32.xlu0 %v575, 64
    %v578 = vpop.permute.xlu0 %577
    %v580 = vadd.f32 %v157, %v578
    %v581 = vtanh.pop %v580
    %v582 = vsub.f32 1.0, %v569
    %584 = vrot.lane.b32.xlu0 %v581, 96
    %v585 = vpop.permute.xlu0 %584
    %v587 = vmul.f32 %v582, %v585
    %v588 = vmul.f32 %v569, %v487
    %v589 = vadd.f32 %v587, %v588
    %591 = vrot.lane.b32.xlu0 %v589, 96
    %v592 = vpop.permute.xlu0 %591
    %v593 = vsel %vm180, %v592, 0
    %595 = vmatprep.subr.mxu0 0.0
    %596 = vmatpush1.msra.mxu0 %v30
    %597 = vmatprep.subr.mxu0 0.0
    %598 = vmatpush1.msra.mxu0 %v31
    %599 = vmatprep.subr.mxu0 0.0
    %600 = vmatpush1.msra.mxu0 %v32
    %601 = vmatprep.subr.mxu0 0.0
    %602 = vmatpush1.msra.mxu0 %v33
    %603 = vmatprep.subr.mxu0 0.0
    %604 = vmatpush1.msra.mxu0 0.0
    %605 = vmatprep.subr.mxu0 0.0
    %606 = vmatpush1.msra.mxu0 0.0
    %607 = vmatprep.subr.mxu0 0.0
    %608 = vmatpush1.msra.mxu0 0.0
    %609 = vmatprep.subr.mxu0 0.0
    %610 = vmatpush1.msra.mxu0 0.0
    %611 = vmatprep.subr.mxu0 0.0
    %612 = vmatpush1.msra.mxu0 0.0
    %613 = vmatprep.subr.mxu0 0.0
    %614 = vmatpush1.msra.mxu0 0.0
    %615 = vmatprep.subr.mxu0 0.0
    %616 = vmatpush1.msra.mxu0 0.0
    %617 = vmatprep.subr.mxu0 0.0
    %618 = vmatpush1.msra.mxu0 0.0
    %619 = vmatprep.subr.mxu0 0.0
    %620 = vmatpush1.msra.mxu0 0.0
    %621 = vmatprep.subr.mxu0 0.0
    %622 = vmatpush1.msra.mxu0 0.0
    %623 = vmatprep.subr.mxu0 0.0
    %624 = vmatpush1.msra.mxu0 0.0
    %625 = vmatprep.subr.mxu0 0.0
    %626 = vmatpush1.msra.mxu0 0.0
    %627 = vmatprep.subr.mxu0 0.0
    %628 = vmatpush1.msra.mxu0 0.0
    %629 = vmatprep.subr.mxu0 0.0
    %630 = vmatpush1.msra.mxu0 0.0
    %631 = vmatprep.subr.mxu0 0.0
    %632 = vmatpush1.msra.mxu0 0.0
    %633 = vmatprep.subr.mxu0 0.0
    %634 = vmatpush1.msra.mxu0 0.0
    %635 = vmatprep.subr.mxu0 0.0
    %636 = vmatpush1.msra.mxu0 0.0
    %637 = vmatprep.subr.mxu0 0.0
    %638 = vmatpush1.msra.mxu0 0.0
    %639 = vmatprep.subr.mxu0 0.0
    %640 = vmatpush1.msra.mxu0 0.0
    %641 = vmatprep.subr.mxu0 0.0
    %642 = vmatpush1.msra.mxu0 0.0
    %643 = vmatprep.subr.mxu0 0.0
    %644 = vmatpush1.msra.mxu0 0.0
    %645 = vmatprep.subr.mxu0 0.0
    %646 = vmatpush1.msra.mxu0 0.0
    %647 = vmatprep.subr.mxu0 0.0
    %648 = vmatpush1.msra.mxu0 0.0
    %649 = vmatprep.subr.mxu0 0.0
    %650 = vmatpush1.msra.mxu0 0.0
    %651 = vmatprep.subr.mxu0 0.0
    %652 = vmatpush1.msra.mxu0 0.0
    %653 = vmatprep.subr.mxu0 0.0
    %654 = vmatpush1.msra.mxu0 0.0
    %655 = vmatprep.subr.mxu0 0.0
    %656 = vmatpush1.msra.mxu0 0.0
    %657 = vmatprep.subr.mxu0 0.0
    %658 = vmatpush1.msra.mxu0 0.0
    %659 = vmatprep.mubr.f32.mxu0 0.0
    %660 = vmatmul.mubr.f32.gmra.mrb[0].mxu0 %v593
    %v661 = vpop.f32.mrb[0].mxu0
    %v662 = vadd.f32 0.0, %v661
    %v663 = vpop.f32.mrb[0].mxu0
    %664 = vdwg.mxu0
    %v665 = vadd.f32 %v162, %v662
    %v666 = vxor.u32 %v665, 2147483648
    %v667 = vmul.f32 %v666, 1.442695
    %v668 = vpow.pop %v667
    %v669 = vadd.f32 %v668, 1.0
    %v670 = vrcp.pop %v669
    %v671 = vmul.f32 1.0, %v670
    %v672 = vadd.f32 %v662, %v262
    %674 = vrot.lane.b32.xlu0 %v672, 64
    %v675 = vpop.permute.xlu0 %674
    %v677 = vmul.f32 %v671, %v675
    %679 = vrot.lane.b32.xlu0 %v677, 64
    %v680 = vpop.permute.xlu0 %679
    %v682 = vadd.f32 %v162, %v680
    %v683 = vtanh.pop %v682
    %v684 = vsub.f32 1.0, %v671
    %686 = vrot.lane.b32.xlu0 %v683, 96
    %v687 = vpop.permute.xlu0 %686
    %v689 = vmul.f32 %v684, %v687
    %v690 = vmul.f32 %v671, %v589
    %v691 = vadd.f32 %v689, %v690
    %693 = vrot.lane.b32.xlu0 %v691, 96
    %v694 = vpop.permute.xlu0 %693
    %v695 = vsel %vm180, %v694, 0
    %697 = vmatprep.subr.mxu0 0.0
    %698 = vmatpush1.msra.mxu0 %v30
    %699 = vmatprep.subr.mxu0 0.0
    %700 = vmatpush1.msra.mxu0 %v31
    %701 = vmatprep.subr.mxu0 0.0
    %702 = vmatpush1.msra.mxu0 %v32
    %703 = vmatprep.subr.mxu0 0.0
    %704 = vmatpush1.msra.mxu0 %v33
    %705 = vmatprep.subr.mxu0 0.0
    %706 = vmatpush1.msra.mxu0 0.0
    %707 = vmatprep.subr.mxu0 0.0
    %708 = vmatpush1.msra.mxu0 0.0
    %709 = vmatprep.subr.mxu0 0.0
    %710 = vmatpush1.msra.mxu0 0.0
    %711 = vmatprep.subr.mxu0 0.0
    %712 = vmatpush1.msra.mxu0 0.0
    %713 = vmatprep.subr.mxu0 0.0
    %714 = vmatpush1.msra.mxu0 0.0
    %715 = vmatprep.subr.mxu0 0.0
    %716 = vmatpush1.msra.mxu0 0.0
    %717 = vmatprep.subr.mxu0 0.0
    %718 = vmatpush1.msra.mxu0 0.0
    %719 = vmatprep.subr.mxu0 0.0
    %720 = vmatpush1.msra.mxu0 0.0
    %721 = vmatprep.subr.mxu0 0.0
    %722 = vmatpush1.msra.mxu0 0.0
    %723 = vmatprep.subr.mxu0 0.0
    %724 = vmatpush1.msra.mxu0 0.0
    %725 = vmatprep.subr.mxu0 0.0
    %726 = vmatpush1.msra.mxu0 0.0
    %727 = vmatprep.subr.mxu0 0.0
    %728 = vmatpush1.msra.mxu0 0.0
    %729 = vmatprep.subr.mxu0 0.0
    %730 = vmatpush1.msra.mxu0 0.0
    %731 = vmatprep.subr.mxu0 0.0
    %732 = vmatpush1.msra.mxu0 0.0
    %733 = vmatprep.subr.mxu0 0.0
    %734 = vmatpush1.msra.mxu0 0.0
    %735 = vmatprep.subr.mxu0 0.0
    %736 = vmatpush1.msra.mxu0 0.0
    %737 = vmatprep.subr.mxu0 0.0
    %738 = vmatpush1.msra.mxu0 0.0
    %739 = vmatprep.subr.mxu0 0.0
    %740 = vmatpush1.msra.mxu0 0.0
    %741 = vmatprep.subr.mxu0 0.0
    %742 = vmatpush1.msra.mxu0 0.0
    %743 = vmatprep.subr.mxu0 0.0
    %744 = vmatpush1.msra.mxu0 0.0
    %745 = vmatprep.subr.mxu0 0.0
    %746 = vmatpush1.msra.mxu0 0.0
    %747 = vmatprep.subr.mxu0 0.0
    %748 = vmatpush1.msra.mxu0 0.0
    %749 = vmatprep.subr.mxu0 0.0
    %750 = vmatpush1.msra.mxu0 0.0
    %751 = vmatprep.subr.mxu0 0.0
    %752 = vmatpush1.msra.mxu0 0.0
    %753 = vmatprep.subr.mxu0 0.0
    %754 = vmatpush1.msra.mxu0 0.0
    %755 = vmatprep.subr.mxu0 0.0
    %756 = vmatpush1.msra.mxu0 0.0
    %757 = vmatprep.subr.mxu0 0.0
    %758 = vmatpush1.msra.mxu0 0.0
    %759 = vmatprep.subr.mxu0 0.0
    %760 = vmatpush1.msra.mxu0 0.0
    %761 = vmatprep.mubr.f32.mxu0 0.0
    %762 = vmatmul.mubr.f32.gmra.mrb[0].mxu0 %v695
    %v763 = vpop.f32.mrb[0].mxu0
    %v764 = vadd.f32 0.0, %v763
    %v765 = vpop.f32.mrb[0].mxu0
    %766 = vdwg.mxu0
    %v767 = vadd.f32 %v167, %v764
    %v768 = vxor.u32 %v767, 2147483648
    %v769 = vmul.f32 %v768, 1.442695
    %v770 = vpow.pop %v769
    %v771 = vadd.f32 %v770, 1.0
    %v772 = vrcp.pop %v771
    %v773 = vmul.f32 1.0, %v772
    %v774 = vadd.f32 %v764, %v262
    %776 = vrot.lane.b32.xlu0 %v774, 64
    %v777 = vpop.permute.xlu0 %776
    %v779 = vmul.f32 %v773, %v777
    %781 = vrot.lane.b32.xlu0 %v779, 64
    %v782 = vpop.permute.xlu0 %781
    %v784 = vadd.f32 %v167, %v782
    %v785 = vtanh.pop %v784
    %v786 = vsub.f32 1.0, %v773
    %788 = vrot.lane.b32.xlu0 %v785, 96
    %v789 = vpop.permute.xlu0 %788
    %v791 = vmul.f32 %v786, %v789
    %v792 = vmul.f32 %v773, %v691
    %v793 = vadd.f32 %v791, %v792
    %795 = vrot.lane.b32.xlu0 %v793, 96
    %v796 = vpop.permute.xlu0 %795
    %v797 = vsel %vm180, %v796, 0
    %799 = vmatprep.subr.mxu0 0.0
    %800 = vmatpush1.msra.mxu0 %v30
    %801 = vmatprep.subr.mxu0 0.0
    %802 = vmatpush1.msra.mxu0 %v31
    %803 = vmatprep.subr.mxu0 0.0
    %804 = vmatpush1.msra.mxu0 %v32
    %805 = vmatprep.subr.mxu0 0.0
    %806 = vmatpush1.msra.mxu0 %v33
    %807 = vmatprep.subr.mxu0 0.0
    %808 = vmatpush1.msra.mxu0 0.0
    %809 = vmatprep.subr.mxu0 0.0
    %810 = vmatpush1.msra.mxu0 0.0
    %811 = vmatprep.subr.mxu0 0.0
    %812 = vmatpush1.msra.mxu0 0.0
    %813 = vmatprep.subr.mxu0 0.0
    %814 = vmatpush1.msra.mxu0 0.0
    %815 = vmatprep.subr.mxu0 0.0
    %816 = vmatpush1.msra.mxu0 0.0
    %817 = vmatprep.subr.mxu0 0.0
    %818 = vmatpush1.msra.mxu0 0.0
    %819 = vmatprep.subr.mxu0 0.0
    %820 = vmatpush1.msra.mxu0 0.0
    %821 = vmatprep.subr.mxu0 0.0
    %822 = vmatpush1.msra.mxu0 0.0
    %823 = vmatprep.subr.mxu0 0.0
    %824 = vmatpush1.msra.mxu0 0.0
    %825 = vmatprep.subr.mxu0 0.0
    %826 = vmatpush1.msra.mxu0 0.0
    %827 = vmatprep.subr.mxu0 0.0
    %828 = vmatpush1.msra.mxu0 0.0
    %829 = vmatprep.subr.mxu0 0.0
    %830 = vmatpush1.msra.mxu0 0.0
    %831 = vmatprep.subr.mxu0 0.0
    %832 = vmatpush1.msra.mxu0 0.0
    %833 = vmatprep.subr.mxu0 0.0
    %834 = vmatpush1.msra.mxu0 0.0
    %835 = vmatprep.subr.mxu0 0.0
    %836 = vmatpush1.msra.mxu0 0.0
    %837 = vmatprep.subr.mxu0 0.0
    %838 = vmatpush1.msra.mxu0 0.0
    %839 = vmatprep.subr.mxu0 0.0
    %840 = vmatpush1.msra.mxu0 0.0
    %841 = vmatprep.subr.mxu0 0.0
    %842 = vmatpush1.msra.mxu0 0.0
    %843 = vmatprep.subr.mxu0 0.0
    %844 = vmatpush1.msra.mxu0 0.0
    %845 = vmatprep.subr.mxu0 0.0
    %846 = vmatpush1.msra.mxu0 0.0
    %847 = vmatprep.subr.mxu0 0.0
    %848 = vmatpush1.msra.mxu0 0.0
    %849 = vmatprep.subr.mxu0 0.0
    %850 = vmatpush1.msra.mxu0 0.0
    %851 = vmatprep.subr.mxu0 0.0
    %852 = vmatpush1.msra.mxu0 0.0
    %853 = vmatprep.subr.mxu0 0.0
    %854 = vmatpush1.msra.mxu0 0.0
    %855 = vmatprep.subr.mxu0 0.0
    %856 = vmatpush1.msra.mxu0 0.0
    %857 = vmatprep.subr.mxu0 0.0
    %858 = vmatpush1.msra.mxu0 0.0
    %859 = vmatprep.subr.mxu0 0.0
    %860 = vmatpush1.msra.mxu0 0.0
    %861 = vmatprep.subr.mxu0 0.0
    %862 = vmatpush1.msra.mxu0 0.0
    %863 = vmatprep.mubr.f32.mxu0 0.0
    %864 = vmatmul.mubr.f32.gmra.mrb[0].mxu0 %v797
    %v865 = vpop.f32.mrb[0].mxu0
    %v866 = vadd.f32 0.0, %v865
    %v867 = vpop.f32.mrb[0].mxu0
    %868 = vdwg.mxu0
    %v869 = vadd.f32 %v172, %v866
    %v870 = vxor.u32 %v869, 2147483648
    %v871 = vmul.f32 %v870, 1.442695
    %v872 = vpow.pop %v871
    %v873 = vadd.f32 %v872, 1.0
    %v874 = vrcp.pop %v873
    %v875 = vmul.f32 1.0, %v874
    %v876 = vadd.f32 %v866, %v262
    %878 = vrot.lane.b32.xlu0 %v876, 64
    %v879 = vpop.permute.xlu0 %878
    %v881 = vmul.f32 %v875, %v879
    %883 = vrot.lane.b32.xlu0 %v881, 64
    %v884 = vpop.permute.xlu0 %883
    %v886 = vadd.f32 %v172, %v884
    %v887 = vtanh.pop %v886
    %v888 = vsub.f32 1.0, %v875
    %890 = vrot.lane.b32.xlu0 %v887, 96
    %v891 = vpop.permute.xlu0 %890
    %v893 = vmul.f32 %v888, %v891
    %v894 = vmul.f32 %v875, %v793
    %v895 = vadd.f32 %v893, %v894
    %897 = vrot.lane.b32.xlu0 %v895, 96
    %v898 = vpop.permute.xlu0 %897
    %v899 = vsel %vm180, %v898, 0
    %901 = vmatprep.subr.mxu0 0.0
    %902 = vmatpush1.msra.mxu0 %v30
    %903 = vmatprep.subr.mxu0 0.0
    %904 = vmatpush1.msra.mxu0 %v31
    %905 = vmatprep.subr.mxu0 0.0
    %906 = vmatpush1.msra.mxu0 %v32
    %907 = vmatprep.subr.mxu0 0.0
    %908 = vmatpush1.msra.mxu0 %v33
    %909 = vmatprep.subr.mxu0 0.0
    %910 = vmatpush1.msra.mxu0 0.0
    %911 = vmatprep.subr.mxu0 0.0
    %912 = vmatpush1.msra.mxu0 0.0
    %913 = vmatprep.subr.mxu0 0.0
    %914 = vmatpush1.msra.mxu0 0.0
    %915 = vmatprep.subr.mxu0 0.0
    %916 = vmatpush1.msra.mxu0 0.0
    %917 = vmatprep.subr.mxu0 0.0
    %918 = vmatpush1.msra.mxu0 0.0
    %919 = vmatprep.subr.mxu0 0.0
    %920 = vmatpush1.msra.mxu0 0.0
    %921 = vmatprep.subr.mxu0 0.0
    %922 = vmatpush1.msra.mxu0 0.0
    %923 = vmatprep.subr.mxu0 0.0
    %924 = vmatpush1.msra.mxu0 0.0
    %925 = vmatprep.subr.mxu0 0.0
    %926 = vmatpush1.msra.mxu0 0.0
    %927 = vmatprep.subr.mxu0 0.0
    %928 = vmatpush1.msra.mxu0 0.0
    %929 = vmatprep.subr.mxu0 0.0
    %930 = vmatpush1.msra.mxu0 0.0
    %931 = vmatprep.subr.mxu0 0.0
    %932 = vmatpush1.msra.mxu0 0.0
    %933 = vmatprep.subr.mxu0 0.0
    %934 = vmatpush1.msra.mxu0 0.0
    %935 = vmatprep.subr.mxu0 0.0
    %936 = vmatpush1.msra.mxu0 0.0
    %937 = vmatprep.subr.mxu0 0.0
    %938 = vmatpush1.msra.mxu0 0.0
    %939 = vmatprep.subr.mxu0 0.0
    %940 = vmatpush1.msra.mxu0 0.0
    %941 = vmatprep.subr.mxu0 0.0
    %942 = vmatpush1.msra.mxu0 0.0
    %943 = vmatprep.subr.mxu0 0.0
    %944 = vmatpush1.msra.mxu0 0.0
    %945 = vmatprep.subr.mxu0 0.0
    %946 = vmatpush1.msra.mxu0 0.0
    %947 = vmatprep.subr.mxu0 0.0
    %948 = vmatpush1.msra.mxu0 0.0
    %949 = vmatprep.subr.mxu0 0.0
    %950 = vmatpush1.msra.mxu0 0.0
    %951 = vmatprep.subr.mxu0 0.0
    %952 = vmatpush1.msra.mxu0 0.0
    %953 = vmatprep.subr.mxu0 0.0
    %954 = vmatpush1.msra.mxu0 0.0
    %955 = vmatprep.subr.mxu0 0.0
    %956 = vmatpush1.msra.mxu0 0.0
    %957 = vmatprep.subr.mxu0 0.0
    %958 = vmatpush1.msra.mxu0 0.0
    %959 = vmatprep.subr.mxu0 0.0
    %960 = vmatpush1.msra.mxu0 0.0
    %961 = vmatprep.subr.mxu0 0.0
    %962 = vmatpush1.msra.mxu0 0.0
    %963 = vmatprep.subr.mxu0 0.0
    %964 = vmatpush1.msra.mxu0 0.0
    %965 = vmatprep.mubr.f32.mxu0 0.0
    %966 = vmatmul.mubr.f32.gmra.mrb[0].mxu0 %v899
    %v967 = vpop.f32.mrb[0].mxu0
    %v968 = vadd.f32 0.0, %v967
    %v969 = vpop.f32.mrb[0].mxu0
    %970 = vdwg.mxu0
    %v971 = vadd.f32 %v177, %v968
    %v972 = vxor.u32 %v971, 2147483648
    %v973 = vmul.f32 %v972, 1.442695
    %v974 = vpow.pop %v973
    %v975 = vadd.f32 %v974, 1.0
    %v976 = vrcp.pop %v975
    %v977 = vmul.f32 1.0, %v976
    %v978 = vadd.f32 %v968, %v262
    %980 = vrot.lane.b32.xlu0 %v978, 64
    %v981 = vpop.permute.xlu0 %980
    %v983 = vmul.f32 %v977, %v981
    %985 = vrot.lane.b32.xlu0 %v983, 64
    %v986 = vpop.permute.xlu0 %985
    %v988 = vadd.f32 %v177, %v986
    %v989 = vtanh.pop %v988
    %v990 = vsub.f32 1.0, %v977
    %992 = vrot.lane.b32.xlu0 %v989, 96
    %v993 = vpop.permute.xlu0 %992
    %v995 = vmul.f32 %v990, %v993
    %v996 = vmul.f32 %v977, %v895
    %v997 = vadd.f32 %v995, %v996
    %v998 = vlaneseq
    %v999 = vshrl.u32 %v998, 7
    %v1000 = vsub.s32 0, %v999
    %v1001 = vrot.slane %v39, %v1000
    %1003 = vrot.lane.b32.xlu0 %v997, 96
    %v1004 = vpop.permute.xlu0 %1003
    %v1005 = vsel %vm180, %v1004, 0
    %1007 = vmatprep.subr.mxu0 0.0
    %1008 = vmatpush1.msra.mxu0 %v35
    %1009 = vmatprep.subr.mxu0 0.0
    %1010 = vmatpush1.msra.mxu0 %v36
    %1011 = vmatprep.subr.mxu0 0.0
    %1012 = vmatpush1.msra.mxu0 %v37
    %1013 = vmatprep.subr.mxu0 0.0
    %1014 = vmatpush1.msra.mxu0 %v38
    %1015 = vmatprep.subr.mxu0 0.0
    %1016 = vmatpush1.msra.mxu0 0.0
    %1017 = vmatprep.subr.mxu0 0.0
    %1018 = vmatpush1.msra.mxu0 0.0
    %1019 = vmatprep.subr.mxu0 0.0
    %1020 = vmatpush1.msra.mxu0 0.0
    %1021 = vmatprep.subr.mxu0 0.0
    %1022 = vmatpush1.msra.mxu0 0.0
    %1023 = vmatprep.subr.mxu0 0.0
    %1024 = vmatpush1.msra.mxu0 0.0
    %1025 = vmatprep.subr.mxu0 0.0
    %1026 = vmatpush1.msra.mxu0 0.0
    %1027 = vmatprep.subr.mxu0 0.0
    %1028 = vmatpush1.msra.mxu0 0.0
    %1029 = vmatprep.subr.mxu0 0.0
    %1030 = vmatpush1.msra.mxu0 0.0
    %1031 = vmatprep.subr.mxu0 0.0
    %1032 = vmatpush1.msra.mxu0 0.0
    %1033 = vmatprep.subr.mxu0 0.0
    %1034 = vmatpush1.msra.mxu0 0.0
    %1035 = vmatprep.subr.mxu0 0.0
    %1036 = vmatpush1.msra.mxu0 0.0
    %1037 = vmatprep.subr.mxu0 0.0
    %1038 = vmatpush1.msra.mxu0 0.0
    %1039 = vmatprep.subr.mxu0 0.0
    %1040 = vmatpush1.msra.mxu0 0.0
    %1041 = vmatprep.subr.mxu0 0.0
    %1042 = vmatpush1.msra.mxu0 0.0
    %1043 = vmatprep.subr.mxu0 0.0
    %1044 = vmatpush1.msra.mxu0 0.0
    %1045 = vmatprep.subr.mxu0 0.0
    %1046 = vmatpush1.msra.mxu0 0.0
    %1047 = vmatprep.subr.mxu0 0.0
    %1048 = vmatpush1.msra.mxu0 0.0
    %1049 = vmatprep.subr.mxu0 0.0
    %1050 = vmatpush1.msra.mxu0 0.0
    %1051 = vmatprep.subr.mxu0 0.0
    %1052 = vmatpush1.msra.mxu0 0.0
    %1053 = vmatprep.subr.mxu0 0.0
    %1054 = vmatpush1.msra.mxu0 0.0
    %1055 = vmatprep.subr.mxu0 0.0
    %1056 = vmatpush1.msra.mxu0 0.0
    %1057 = vmatprep.subr.mxu0 0.0
    %1058 = vmatpush1.msra.mxu0 0.0
    %1059 = vmatprep.subr.mxu0 0.0
    %1060 = vmatpush1.msra.mxu0 0.0
    %1061 = vmatprep.subr.mxu0 0.0
    %1062 = vmatpush1.msra.mxu0 0.0
    %1063 = vmatprep.subr.mxu0 0.0
    %1064 = vmatpush1.msra.mxu0 0.0
    %1065 = vmatprep.subr.mxu0 0.0
    %1066 = vmatpush1.msra.mxu0 0.0
    %1067 = vmatprep.subr.mxu0 0.0
    %1068 = vmatpush1.msra.mxu0 0.0
    %1069 = vmatprep.subr.mxu0 0.0
    %1070 = vmatpush1.msra.mxu0 0.0
    %1071 = vmatprep.mubr.f32.mxu0 0.0
    %1072 = vmatmul.mubr.f32.gmra.mrb[0].mxu0 %v1005
    %v1073 = vpop.f32.mrb[0].mxu0
    %v1074 = vadd.f32 %v1001, %v1073
    %v1075 = vpop.f32.mrb[0].mxu0
    %1076 = vdwg.mxu0
    %vm1077 = vcmask 58368
    %1078 = vst.msk [vmem:[#allocation2] sm:$0x3] %vm1077, %v1074
    // Predicated region
    $region22: #{tpu_custom_call.1} parent=1 // pred_check
      _
    $region23: #{tpu_custom_call.1} parent=1 // pred_check_branch
      %1080 = sbr.rel (0) target = $region25
    $region24: #{tpu_custom_call.1} parent=1 // pred_region
      %s1082 = ssub.s32 32, 32
      %1083 = vsyncadd [#allocation3], %s1082
      %s1085 = sshll.u32 [#allocation2], 4
      %s1086 = int_to_ptr.vmem [resolvable:$true] %s1085
      %1088 = dma.vmem_to_hbm [thread:$0]  %s1086, 32, %s5, [#allocation3]
    $region25: #{tpu_custom_call.1} parent=1 // pred_fallthru
      _
    // Predicated region
    $region26: #{tpu_custom_call.1} parent=1 // pred_check
      _
    $region27: #{tpu_custom_call.1} parent=1 // pred_check_branch
      %1090 = sbr.rel (0) target = $region29
    $region28: #{tpu_custom_call.1} parent=1 // pred_region
      %1091 = dma.done [#allocation3], 32
    $region29: #{tpu_custom_call.1} parent=1 // pred_fallthru
      _
    %1092 = vsyncpa [#allocation3], 1

</llo_original>
